<compile_context>
chip_gen: v5e
topology: v5e:2x2
jax: 0.10.0
libtpu: 0.0.40
codegen_flags: <defaults>
</compile_context>

<pallas_src>
import jax
import jax.numpy as jnp
from jax.experimental import pallas as pl
from jax.experimental.pallas import tpu as pltpu

KSIZE = 5
N_FILT = 30
TLU_T = 3.0


def _round_up(v, m):
    return ((v + m - 1) // m) * m


def hpf_kernel(w_ref, c_ref, o_ref):
    # w_ref: (30, 25*C)         flat filter-bank slab (grid-invariant, resident)
    # c_ref: (25*C, LANE_TILE)  im2col columns for this (image, lane-tile)
    # o_ref: (30, LANE_TILE)    lane-dense output tile
    acc = jnp.dot(w_ref[...], c_ref[...], preferred_element_type=jnp.float32)
    o_ref[...] = jnp.clip(acc, -TLU_T, TLU_T).astype(o_ref.dtype)


def _choose_lane_tile(hw, max_tile=2048):
    """Multiple of 128, capped at max_tile, covering the per-image spatial dim."""
    hw128 = _round_up(max(hw, 1), 128)
    return min(max_tile, hw128)


def hpf_forward(x, weight, *, lane_tile=None):
    """x: (N, C, H, W) float32, weight: (30, C, 5, 5) float32 -> (N, 30, H, W)."""
    N, C, H, W = x.shape
    K = KSIZE * KSIZE * C
    HW = H * W

    if lane_tile is None:
        lane_tile = _choose_lane_tile(HW)
    hw_pad = _round_up(HW, lane_tile)
    num_tiles = hw_pad // lane_tile

    # Flat 2-D weight slab (30, C*25); K index = ci*25 + dy*5 + dx.
    w2d = weight.reshape(N_FILT, K).astype(jnp.float32)

    # im2col data prep (same 'padding=2' zero-pad semantics as the Conv2d):
    # cols[n, k, h*W + w] = x_pad[n, ci, h+dy, w+dx], k = ci*25 + dy*5 + dx.
    xp = jnp.pad(x, ((0, 0), (0, 0), (2, 2), (2, 2)))
    taps = [xp[:, :, dy:dy + H, dx:dx + W]
            for dy in range(KSIZE) for dx in range(KSIZE)]   # each (N, C, H, W)
    cols = jnp.stack(taps, axis=2)                           # (N, C, 25, H, W)
    cols = cols.reshape(N, K, HW)                            # contiguous, no transpose
    cols = jnp.pad(cols, ((0, 0), (0, 0), (0, hw_pad - HW))).astype(jnp.float32)

    out_flat = pl.pallas_call(
        hpf_kernel,
        out_shape=jax.ShapeDtypeStruct((N, N_FILT, hw_pad), jnp.float32),
        grid_spec=pltpu.PrefetchScalarGridSpec(
            num_scalar_prefetch=0,
            grid=(N, num_tiles),
            in_specs=[
                # weight slab: same block every step -> stays resident in VMEM
                pl.BlockSpec((N_FILT, K), lambda n, t: (0, 0)),
                # im2col tile for image n, lane-tile t (leading dim squeezed)
                pl.BlockSpec((None, K, lane_tile), lambda n, t: (n, 0, t)),
            ],
            out_specs=pl.BlockSpec((None, N_FILT, lane_tile),
                                   lambda n, t: (n, 0, t)),
        ),
        compiler_params=pltpu.CompilerParams(
            dimension_semantics=("parallel", "parallel"),
        ),
    )(w2d, cols)

    out = out_flat[:, :, :HW].reshape(N, N_FILT, H, W)
    return out.astype(x.dtype)


def make_hpf_weight(c_in, key):
    """Deterministic stand-in for all_normalized_hpf_list:
    8 filters start as 3x3 (padded to 5x5 like the module does), 22 are 5x5,
    all zero-mean (high-pass-like), repeated over the input channels exactly
    like `.view(30,1,5,5).repeat(1, c.stego_img_channel, 1, 1)`."""
    k3, k5 = jax.random.split(key)
    f3 = jax.random.normal(k3, (8, 3, 3), jnp.float32)
    f3 = f3 - f3.mean(axis=(1, 2), keepdims=True)
    f3 = jnp.pad(f3, ((0, 0), (1, 1), (1, 1)))               # 3x3 -> 5x5, zero border
    f5 = jax.random.normal(k5, (22, 5, 5), jnp.float32)
    f5 = f5 - f5.mean(axis=(1, 2), keepdims=True)
    filt = jnp.concatenate([f3, f5], axis=0)                 # (30, 5, 5)
    return jnp.repeat(filt[:, None, :, :], c_in, axis=1)     # (30, C_in, 5, 5)


if __name__ == "__main__":
    key = jax.random.PRNGKey(0)
    kx, kw = jax.random.split(key)

    N, C, H, W = 2, 3, 16, 16            # c.stego_img_channel = 3
    x = jax.random.normal(kx, (N, C, H, W), jnp.float32)
    weight = make_hpf_weight(C, kw)

    out = jax.block_until_ready(hpf_forward(x, weight))

    # Pure-JAX reference (Conv2d padding=2, no bias, then clamp).
    ref = jax.lax.conv_general_dilated(
        x, weight, window_strides=(1, 1), padding=((2, 2), (2, 2)),
        dimension_numbers=("NCHW", "OIHW", "NCHW"))
    ref = jnp.clip(ref, -TLU_T, TLU_T)

    assert out.shape == (N, N_FILT, H, W)
    assert jnp.allclose(out, ref, atol=1e-4, rtol=1e-4)
    print("KERNEL_OK")
</pallas_src>

<mosaic_0001>
module attributes {stable_mosaic.version = 11 : i64} {
  func.func @hpf_kernel(%arg0: i32, %arg1: i32, %arg2: memref<30x75xf32, #tpu.memory_space<vmem>>, %arg3: memref<1x75x256xf32, #tpu.memory_space<vmem>>, %arg4: memref<1x30x256xf32, #tpu.memory_space<vmem>>) attributes {dimension_semantics = [#tpu.dimension_semantics<parallel>, #tpu.dimension_semantics<parallel>], iteration_bounds = array<i64: 2, 1>, scalar_prefetch = 0 : i64, scratch_operands = 0 : i64, tpu.core_type = #tpu.core_type<tc>, window_params = [{pipeline_mode = #tpu.pipeline_mode<synchronous>, transform_indices = @transform_0, window_bounds = array<i64: 30, 75>}, {transform_indices = @transform_1, window_bounds = array<i64: 1, 75, 256>}, {transform_indices = @transform_2, window_bounds = array<i64: 1, 30, 256>}]} {
    %c0 = arith.constant 0 : index
    %c0_0 = arith.constant 0 : index
    %0 = vector.load %arg2[%c0, %c0_0] : memref<30x75xf32, #tpu.memory_space<vmem>>, vector<30x75xf32>
    %c0_1 = arith.constant 0 : index
    %c0_2 = arith.constant 0 : index
    %c0_3 = arith.constant 0 : index
    %1 = vector.load %arg3[%c0_1, %c0_2, %c0_3] : memref<1x75x256xf32, #tpu.memory_space<vmem>>, vector<1x75x256xf32>
    %2 = vector.shape_cast %1 : vector<1x75x256xf32> to vector<75x256xf32>
    %cst = arith.constant dense<0.000000e+00> : vector<30x256xf32>
    %3 = tpu.matmul %0, %2, %cst {dimension_numbers = #tpu.dot_dimension_numbers<[1], [0], [0], [1], [0, 0, 1, 1], [], []>} : vector<30x75xf32>, vector<75x256xf32>, vector<30x256xf32> -> vector<30x256xf32>
    %cst_4 = arith.constant -3.000000e+00 : f32
    %cst_5 = arith.constant 3.000000e+00 : f32
    %4 = vector.broadcast %cst_4 : f32 to vector<30x256xf32>
    %5 = arith.maximumf %4, %3 : vector<30x256xf32>
    %6 = vector.broadcast %cst_5 : f32 to vector<30x256xf32>
    %7 = arith.minimumf %6, %5 : vector<30x256xf32>
    %c0_6 = arith.constant 0 : index
    %c0_7 = arith.constant 0 : index
    %c0_8 = arith.constant 0 : index
    %8 = vector.load %arg4[%c0_6, %c0_7, %c0_8] : memref<1x30x256xf32, #tpu.memory_space<vmem>>, vector<1x30x256xf32>
    %9 = vector.shape_cast %8 : vector<1x30x256xf32> to vector<30x256xf32>
    %10 = vector.shape_cast %7 : vector<30x256xf32> to vector<1x30x256xf32>
    tpu.vector_store %arg4[%c0_6, %c0_7, %c0_8], %10 {strides = array<i32>} : memref<1x30x256xf32, #tpu.memory_space<vmem>>, vector<1x30x256xf32>,
    return
  }
  func.func @transform_0(%arg0: i32, %arg1: i32) -> (i32, i32) {
    %c0_i32 = arith.constant 0 : i32
    %c0_i32_0 = arith.constant 0 : i32
    %c0_i32_1 = arith.constant 0 : i32
    return %c0_i32, %c0_i32_0 : i32, i32
  }
  func.func @transform_1(%arg0: i32, %arg1: i32) -> (i32, i32, i32) {
    %c0_i32 = arith.constant 0 : i32
    %c0_i32_0 = arith.constant 0 : i32
    return %arg0, %c0_i32, %arg1 : i32, i32, i32
  }
  func.func @transform_2(%arg0: i32, %arg1: i32) -> (i32, i32, i32) {
    %c0_i32 = arith.constant 0 : i32
    %c0_i32_0 = arith.constant 0 : i32
    return %arg0, %c0_i32, %arg1 : i32, i32, i32
  }
}

</mosaic_0001>

<llo_original>
// kernel: tpu_custom_call.1
$region0: #{tpu_custom_call.1}
  #allocation0 [shape = 'u32[]', space=smem, size = 0x4, offset = 0x4, fixed_abs, tag = 'smem constant byte address 0x4 - core index']
  #allocation1 [shape = 'u32[72,128]{1,0:T(1,128)}', space=vmem, size = 0x9000, scoped, tag = 'internal scratch']
  %s0 = inlined_call_operand.vmem [shape: f32[30,75], index: 0, kind: input, shape index: {}]
  %s1 = inlined_call_operand.vmem [shape: f32[2,75,256], index: 1, kind: input, shape index: {}]
  %s2 = inlined_call_operand.vmem [shape: f32[2,30,256], index: 2, kind: output, shape index: {}]
  %s3 = sld [smem:[#allocation0]]
  $region41: #{tpu_custom_call.1} parent=0
    _
  %s5 = ssub.s32 1, %s3
  %s6 = scalar_select 0, %s5, %s3
  loop: start=0, step=1, limit=4
  $region2: #{tpu_custom_call.1} parent=0 // loop_pre_header
    _
  $region3: #{tpu_custom_call.1} parent=0 // loop_header
    %s8 = sphi 0, %s12
    %p9 = scmp.ge.s32.totalorder %s8, 4
    %s15 = sphi 0, %s27
    %s16 = sphi 0, %s23
    %s17 = sphi 0, %s15
    %s18 = sphi 0, %s16
    %s19 = sphi 0, %s17
    %s20 = sphi 0, %s18
    %s28 = sphi 0, %s28
    %s30 = sphi 0, %s28
    %s31 = sphi 0, %s30
    %s45 = sphi 0, %s31
    %s53 = sphi 0, %s55
    %s56 = sphi 0, %s53
    %s57 = sphi 0, %s56
    %s73 = sphi 0, %s57
    %s81 = sphi 0, %s83
    %s84 = sphi 0, %s81
    %s85 = sphi 0, %s84
    %s101 = sphi 0, %s85
  $region4: #{tpu_custom_call.1} parent=0 // loop_header_branch
    %11 = sbr.rel (%p9) target = $region8
  $region5: #{tpu_custom_call.1} parent=0 // loop_body
    %s13 = ssub.s32 %s8, 1
    %s14 = ssub.s32 %s8, 2
    %s21 = sadd.s32 1, %s16
    %p22 = scmp.ge.s32.totalorder %s21, 1
    %s23 = scalar_select %p22, 0, %s21
    %s24 = sadd.s32 1, %s15
    %s25 = scalar_select %p22, %s24, %s15
    %p26 = scmp.ge.s32.totalorder %s25, 2
    %s27 = scalar_select %p26, 0, %s25
    %s29 = sadd.s32 %s28, 1
    %p32 = scmp.eq.s32.totalorder %s8, 1
    %p33 = scmp.ne.s32.totalorder %s28, %s30
    %p34 = scmp.eq.s32.totalorder %s8, 0
    %p35 = por %p33, %p34
    %p36 = scmp.ne.s32.totalorder %s28, %s30
    %p37 = scmp.eq.s32.totalorder %s13, 1
    %p38 = por %p36, %p37
    %p39 = scmp.ne.s32.totalorder %s30, %s31
    %p40 = scmp.eq.s32.totalorder %s13, 0
    %p41 = por %p39, %p40
    %p42 = scmp.ne.s32.totalorder %s30, %s31
    %p43 = scmp.eq.s32.totalorder %s14, 1
    %p44 = por %p42, %p43
    %p46 = scmp.ne.s32.totalorder %s31, %s45
    %p47 = scmp.eq.s32.totalorder %s14, 0
    %p48 = por %p46, %p47
    %s49 = ssub.s32 %s15, %s27
    %s50 = ssub.s32 %s16, %s23
    %s51 = sor.u32 %s49, %s50
    %p52 = scmp.eq.s32.totalorder %s51, 0
    %s54 = sadd.s32 %s53, 1
    %s55 = scalar_select %p52, %s53, %s54
    %p58 = pneg %p52
    %p59 = scmp.eq.s32.totalorder %s8, 1
    %p60 = por %p58, %p59
    %p61 = scmp.ne.s32.totalorder %s53, %s56
    %p62 = scmp.eq.s32.totalorder %s8, 0
    %p63 = por %p61, %p62
    %p64 = scmp.ne.s32.totalorder %s53, %s56
    %p65 = scmp.eq.s32.totalorder %s13, 1
    %p66 = por %p64, %p65
    %p67 = scmp.ne.s32.totalorder %s56, %s57
    %p68 = scmp.eq.s32.totalorder %s13, 0
    %p69 = por %p67, %p68
    %p70 = scmp.ne.s32.totalorder %s56, %s57
    %p71 = scmp.eq.s32.totalorder %s14, 1
    %p72 = por %p70, %p71
    %p74 = scmp.ne.s32.totalorder %s57, %s73
    %p75 = scmp.eq.s32.totalorder %s14, 0
    %p76 = por %p74, %p75
    %s77 = ssub.s32 %s15, %s27
    %s78 = ssub.s32 %s16, %s23
    %s79 = sor.u32 %s77, %s78
    %p80 = scmp.eq.s32.totalorder %s79, 0
    %s82 = sadd.s32 %s81, 1
    %s83 = scalar_select %p80, %s81, %s82
    %p86 = pneg %p80
    %p87 = scmp.eq.s32.totalorder %s8, 1
    %p88 = por %p86, %p87
    %p89 = scmp.ne.s32.totalorder %s81, %s84
    %p90 = scmp.eq.s32.totalorder %s8, 0
    %p91 = por %p89, %p90
    %p92 = scmp.ne.s32.totalorder %s81, %s84
    %p93 = scmp.eq.s32.totalorder %s13, 1
    %p94 = por %p92, %p93
    %p95 = scmp.ne.s32.totalorder %s84, %s85
    %p96 = scmp.eq.s32.totalorder %s13, 0
    %p97 = por %p95, %p96
    %p98 = scmp.ne.s32.totalorder %s84, %s85
    %p99 = scmp.eq.s32.totalorder %s14, 1
    %p100 = por %p98, %p99
    %p102 = scmp.ne.s32.totalorder %s85, %s101
    %p103 = scmp.eq.s32.totalorder %s14, 0
    %p104 = por %p102, %p103
    %p105 = scmp.le.s32.totalorder 1, %s8
    %p106 = scmp.lt.s32.totalorder %s8, 3
    %p107 = pnand %p105, %p106
    %p108 = pneg %p107
    // Predicated region
    $region9: #{tpu_custom_call.1} parent=5 // pred_check
      _
    $region10: #{tpu_custom_call.1} parent=5 // pred_check_branch
      %110 = sbr.rel (%p107) target = $region12
    $region11: #{tpu_custom_call.1} parent=5 // pred_region
      %s111 = ssub.s32 %s8, 1
      // Predicated region
      $region13: #{tpu_custom_call.1} parent=11 // pred_check
        %p112 = pneg %p41
      $region14: #{tpu_custom_call.1} parent=11 // pred_check_branch
        %114 = sbr.rel (%p112) target = $region16
      $region15: #{tpu_custom_call.1} parent=11 // pred_region
        _
      $region16: #{tpu_custom_call.1} parent=11 // pred_fallthru
        _
    $region12: #{tpu_custom_call.1} parent=5 // pred_fallthru
      _
    %p115 = scmp.lt.s32.totalorder %s8, 2
    // Predicated region
    $region17: #{tpu_custom_call.1} parent=5 // pred_check
      %p116 = pneg %p115
    $region18: #{tpu_custom_call.1} parent=5 // pred_check_branch
      %118 = sbr.rel (%p116) target = $region20
    $region19: #{tpu_custom_call.1} parent=5 // pred_region
      // Predicated region
      $region21: #{tpu_custom_call.1} parent=19 // pred_check
        %p119 = pneg %p63
      $region22: #{tpu_custom_call.1} parent=19 // pred_check_branch
        %121 = sbr.rel (%p119) target = $region24
      $region23: #{tpu_custom_call.1} parent=19 // pred_region
        %s122 = smul.u32 2, %s16
        %p123 = scmp.lt.s32.totalorder %s15, 1
        %s124 = scalar_select %p123, %s15, 1
        %p125 = scmp.lt.s32.totalorder %s122, 1
        %s126 = scalar_select %p125, %s122, 1
        %s127 = smul.addr %s124, 20
        %s128 = sadd.s32 %s126, %s127
        %s129 = smul.addr %s128, 8
        %s130 = scalar_lea.vmem %s1, %s129
        %s131 = smul.u32 2, %s16
      $region24: #{tpu_custom_call.1} parent=19 // pred_fallthru
        _
    $region20: #{tpu_custom_call.1} parent=5 // pred_fallthru
      _
    %p132 = scmp.le.s32.totalorder 1, %s8
    %p133 = scmp.lt.s32.totalorder %s8, 3
    %p134 = pnand %p132, %p133
    %p135 = pneg %p134
    // Predicated region
    $region25: #{tpu_custom_call.1} parent=5 // pred_check
      _
    $region26: #{tpu_custom_call.1} parent=5 // pred_check_branch
      %137 = sbr.rel (%p134) target = $region28
    $region27: #{tpu_custom_call.1} parent=5 // pred_region
      %s138 = ssub.s32 %s8, 1
      %p139 = pneg %p41
      %p140 = pneg %p38
      %s141 = smul.u32 2, %s18
      %p142 = scmp.lt.s32.totalorder %s17, 1
      %s143 = scalar_select %p142, %s17, 1
      %p144 = scmp.lt.s32.totalorder %s141, 1
      %s145 = scalar_select %p144, %s141, 1
      %s146 = smul.addr %s143, 20
      %s147 = sadd.s32 %s145, %s146
      %s148 = smul.addr %s147, 8
      %s149 = scalar_lea.vmem %s1, %s148
      %p150 = pneg %p69
      %p151 = pneg %p66
      %p152 = pneg %p97
      %p153 = pneg %p94
      %s154 = smul.u32 2, %s18
      %p155 = scmp.lt.s32.totalorder %s17, 1
      %s156 = scalar_select %p155, %s17, 1
      %p157 = scmp.lt.s32.totalorder %s154, 1
      %s158 = scalar_select %p157, %s154, 1
      %s159 = smul.addr %s156, 8
      %s160 = sadd.s32 %s158, %s159
      %s161 = smul.addr %s160, 8
      %s162 = scalar_lea.vmem %s2, %s161
      %s163 = smul.u32 2, %s18
      %p164 = scmp.lt.s32.totalorder %s17, 1
      %s165 = scalar_select %p164, %s17, 1
      %p166 = scmp.lt.s32.totalorder %s163, 1
      %s167 = scalar_select %p166, %s163, 1
      %s168 = smul.addr %s165, 20
      %s169 = sadd.s32 %s167, %s168
      %s170 = smul.addr %s169, 8
      %s171 = scalar_lea.vmem %s1, %s170
      %s172 = smul.u32 2, %s18
      %s173 = smul.u32 2, %s18
      %p174 = scmp.lt.s32.totalorder %s17, 1
      %s175 = scalar_select %p174, %s17, 1
      %p176 = scmp.lt.s32.totalorder %s173, 1
      %s177 = scalar_select %p176, %s173, 1
      %s178 = smul.addr %s175, 8
      %s179 = sadd.s32 %s177, %s178
      %s180 = smul.addr %s179, 8
      %s181 = scalar_lea.vmem %s2, %s180
      %s182 = smul.u32 2, %s18
      %v183 = vld [vmem:[%s0] sm:$0xff]
      %v184 = vld [vmem:[%s0 + $0x8] sm:$0xff]
      %v185 = vld [vmem:[%s0 + $0x10] sm:$0xff]
      %v186 = vld [vmem:[%s0 + $0x18] sm:$0x3f]
      %v187 = vld [vmem:[%s171] sm:$0xff]
      %v188 = vld [vmem:[%s171 + $0x8] sm:$0xff]
      %v189 = vld [vmem:[%s171 + $0x10] sm:$0xff]
      %v190 = vld [vmem:[%s171 + $0x18] sm:$0xff]
      %v191 = vld [vmem:[%s171 + $0x20] sm:$0xff]
      %v192 = vld [vmem:[%s171 + $0x28] sm:$0xff]
      %v193 = vld [vmem:[%s171 + $0x30] sm:$0xff]
      %v194 = vld [vmem:[%s171 + $0x38] sm:$0xff]
      %v195 = vld [vmem:[%s171 + $0x40] sm:$0xff]
      %v196 = vld [vmem:[%s171 + $0x48] sm:$0xff]
      %v197 = vld [vmem:[%s171 + $0x50] sm:$0xff]
      %v198 = vld [vmem:[%s171 + $0x58] sm:$0xff]
      %v199 = vld [vmem:[%s171 + $0x60] sm:$0xff]
      %v200 = vld [vmem:[%s171 + $0x68] sm:$0xff]
      %v201 = vld [vmem:[%s171 + $0x70] sm:$0xff]
      %v202 = vld [vmem:[%s171 + $0x78] sm:$0xff]
      %v203 = vld [vmem:[%s171 + $0x80] sm:$0xff]
      %v204 = vld [vmem:[%s171 + $0x88] sm:$0xff]
      %v205 = vld [vmem:[%s171 + $0x90] sm:$0x7]
      %v206 = vld [vmem:[%s171 + $0x98] sm:$0x7]
      %vm207 = vcmask 613376
      %v209 = vsel %vm207, %v183, 0
      %v212 = vsel %vm207, %v184, 0
      %v215 = vsel %vm207, %v185, 0
      %v218 = vsel %vm207, %v186, 0
      %vm220 = vcmask 1042432
      %v222 = vsel %vm220, %v205, 0
      %v225 = vsel %vm220, %v206, 0
      %227 = vmatpush.msra.mxu0 0.0
      %228 = vmatpush.msra.mxu0 0.0
      %229 = vmatpush.msra.mxu0 0.0
      %230 = vmatpush.msra.mxu0 0.0
      %231 = vmatpush.msra.mxu0 0.0
      %232 = vmatpush.msra.mxu0 0.0
      %233 = vmatpush.msra.mxu0 %v222
      %234 = vmatpush.msra.mxu0 %v203
      %235 = vmatpush.msra.mxu0 %v201
      %236 = vmatpush.msra.mxu0 %v199
      %237 = vmatpush.msra.mxu0 %v197
      %238 = vmatpush.msra.mxu0 %v195
      %239 = vmatpush.msra.mxu0 %v193
      %240 = vmatpush.msra.mxu0 %v191
      %241 = vmatpush.msra.mxu0 %v189
      %242 = vmatpush.msra.mxu0 %v187
      %243 = vmatmul.f32.gmra.mxu0 %v209
      %v244 = vpop.f32.mrf.mxu0
      %v245 = vadd.f32 0.0, %v244
      %246 = vmatmul.f32.gmra.mxu0 %v212
      %v247 = vpop.f32.mrf.mxu0
      %v248 = vadd.f32 0.0, %v247
      %249 = vmatmul.f32.gmra.mxu0 %v215
      %v250 = vpop.f32.mrf.mxu0
      %v251 = vadd.f32 0.0, %v250
      %252 = vmatmul.f32.gmra.mxu0 %v218
      %v253 = vpop.f32.mrf.mxu0
      %v254 = vadd.f32 0.0, %v253
      %255 = vdwg.mxu0
      %256 = vmatpush.msra.mxu0 0.0
      %257 = vmatpush.msra.mxu0 0.0
      %258 = vmatpush.msra.mxu0 0.0
      %259 = vmatpush.msra.mxu0 0.0
      %260 = vmatpush.msra.mxu0 0.0
      %261 = vmatpush.msra.mxu0 0.0
      %262 = vmatpush.msra.mxu0 %v225
      %263 = vmatpush.msra.mxu0 %v204
      %264 = vmatpush.msra.mxu0 %v202
      %265 = vmatpush.msra.mxu0 %v200
      %266 = vmatpush.msra.mxu0 %v198
      %267 = vmatpush.msra.mxu0 %v196
      %268 = vmatpush.msra.mxu0 %v194
      %269 = vmatpush.msra.mxu0 %v192
      %270 = vmatpush.msra.mxu0 %v190
      %271 = vmatpush.msra.mxu0 %v188
      %272 = vmatmul.f32.gmra.mxu0 %v209
      %v273 = vpop.f32.mrf.mxu0
      %v274 = vadd.f32 0.0, %v273
      %275 = vmatmul.f32.gmra.mxu0 %v212
      %v276 = vpop.f32.mrf.mxu0
      %v277 = vadd.f32 0.0, %v276
      %278 = vmatmul.f32.gmra.mxu0 %v215
      %v279 = vpop.f32.mrf.mxu0
      %v280 = vadd.f32 0.0, %v279
      %281 = vmatmul.f32.gmra.mxu0 %v218
      %v282 = vpop.f32.mrf.mxu0
      %v283 = vadd.f32 0.0, %v282
      %284 = vdwg.mxu0
      %v285 = vmax.f32 %v245, -3.0
      %v286 = vmax.f32 %v274, -3.0
      %v287 = vmax.f32 %v248, -3.0
      %v288 = vmax.f32 %v277, -3.0
      %v289 = vmax.f32 %v251, -3.0
      %v290 = vmax.f32 %v280, -3.0
      %v291 = vmax.f32 %v254, -3.0
      %v292 = vmax.f32 %v283, -3.0
      %v293 = vmin.f32 %v285, 3.0
      %v294 = vmin.f32 %v286, 3.0
      %v295 = vmin.f32 %v287, 3.0
      %v296 = vmin.f32 %v288, 3.0
      %v297 = vmin.f32 %v289, 3.0
      %v298 = vmin.f32 %v290, 3.0
      %v299 = vmin.f32 %v291, 3.0
      %v300 = vmin.f32 %v292, 3.0
      %301 = vst [vmem:[%s181] sm:$0xff] %v293
      %302 = vst [vmem:[%s181 + $0x8] sm:$0xff] %v294
      %303 = vst [vmem:[%s181 + $0x10] sm:$0xff] %v295
      %304 = vst [vmem:[%s181 + $0x18] sm:$0xff] %v296
      %305 = vst [vmem:[%s181 + $0x20] sm:$0xff] %v297
      %306 = vst [vmem:[%s181 + $0x28] sm:$0xff] %v298
      %307 = vst [vmem:[%s181 + $0x30] sm:$0x3f] %v299
      %308 = vst [vmem:[%s181 + $0x38] sm:$0x3f] %v300
      %s309 = smul.u32 2, %s18
      %p310 = scmp.lt.s32.totalorder %s17, 1
      %s311 = scalar_select %p310, %s17, 1
      %p312 = scmp.lt.s32.totalorder %s309, 1
      %s313 = scalar_select %p312, %s309, 1
      %s314 = smul.addr %s311, 8
      %s315 = sadd.s32 %s313, %s314
      %s316 = smul.addr %s315, 8
      %s317 = scalar_lea.vmem %s2, %s316
      // Predicated region
      $region29: #{tpu_custom_call.1} parent=27 // pred_check
        %p318 = pneg %p94
      $region30: #{tpu_custom_call.1} parent=27 // pred_check_branch
        %320 = sbr.rel (%p318) target = $region32
      $region31: #{tpu_custom_call.1} parent=27 // pred_region
        %s321 = smul.u32 2, %s18
      $region32: #{tpu_custom_call.1} parent=27 // pred_fallthru
        _
    $region28: #{tpu_custom_call.1} parent=5 // pred_fallthru
      _
    %p322 = scmp.le.s32.totalorder 2, %s8
    // Predicated region
    $region33: #{tpu_custom_call.1} parent=5 // pred_check
      %p323 = pneg %p322
    $region34: #{tpu_custom_call.1} parent=5 // pred_check_branch
      %325 = sbr.rel (%p323) target = $region36
    $region35: #{tpu_custom_call.1} parent=5 // pred_region
      %s326 = ssub.s32 %s8, 2
      // Predicated region
      $region37: #{tpu_custom_call.1} parent=35 // pred_check
        %p327 = pneg %p100
      $region38: #{tpu_custom_call.1} parent=35 // pred_check_branch
        %329 = sbr.rel (%p327) target = $region40
      $region39: #{tpu_custom_call.1} parent=35 // pred_region
        %s330 = smul.u32 2, %s20
        %p331 = scmp.lt.s32.totalorder %s19, 1
        %s332 = scalar_select %p331, %s19, 1
        %p333 = scmp.lt.s32.totalorder %s330, 1
        %s334 = scalar_select %p333, %s330, 1
        %s335 = smul.addr %s332, 8
        %s336 = sadd.s32 %s334, %s335
        %s337 = smul.addr %s336, 8
        %s338 = scalar_lea.vmem %s2, %s337
      $region40: #{tpu_custom_call.1} parent=35 // pred_fallthru
        _
    $region36: #{tpu_custom_call.1} parent=5 // pred_fallthru
      _
  $region6: #{tpu_custom_call.1} parent=0 // loop_footer
    %s12 = sadd.s32 1, %s8
  $region7: #{tpu_custom_call.1} parent=0 // loop_footer_branch
    %7 = sbr.rel target = $region3
  $region8: #{tpu_custom_call.1} parent=0 // loop_exit
    _

</llo_original>
